<compile_context>
chip_gen: v7x
topology: tpu7x:2x2x1
jax: 0.10.0
libtpu: 0.0.40
codegen_flags: <defaults>
</compile_context>

<pallas_src>
import functools

import numpy as np
import jax
import jax.numpy as jnp
from jax import lax
from jax.experimental import pallas as pl
from jax.experimental.pallas import tpu as pltpu

BN_EPS = 1e-5
_VMEM_TILE_BUDGET = 24 << 20          # per-step working-set target (all gens)


def _round_up(x, m):
    return ((x + m - 1) // m) * m


# ----------------------------- Pallas kernels -------------------------------

def _conv_matmul_kernel(p_ref, w_ref, b_ref, out_ref, *stat_refs,
                        add_bias, apply_relu, compute_stats):
    """Row-tiled, K-tiled conv matmul with optional fused bias/ReLU and
    per-row-tile batch-statistic partials.

    p_ref   : (TM, TK)       im2col row tile (rows = flattened B*Ho*Wo)
    w_ref   : (TK, Npad)     conv weight K-tile (Cout padded to 128 lanes)
    b_ref   : (1, Npad)      conv bias row (used only on the no-BN path)
    out_ref : (TM, Npad)     conv output tile, revisited across the K axis
                             (accumulator), written back to HBM per row tile
    stat_refs (optional):
      stat_ref : (1, 8, Npad) per-row-tile stats; sublane 0 = sum, 1 = sum x^2
    """
    k = pl.program_id(1)

    part = jnp.dot(p_ref[...], w_ref[...], preferred_element_type=jnp.float32)

    @pl.when(k == 0)
    def _init():
        out_ref[...] = part

    @pl.when(k > 0)
    def _accum():
        out_ref[...] += part

    if add_bias or apply_relu or compute_stats:
        @pl.when(k == pl.num_programs(1) - 1)
        def _finalize():
            y = out_ref[...]
            if add_bias:
                y = y + b_ref[...]
            if apply_relu:
                y = jnp.maximum(y, 0.0)
            if add_bias or apply_relu:
                out_ref[...] = y
            if compute_stats:
                s_ref = stat_refs[0]
                s_ref[...] = jnp.zeros_like(s_ref)
                s_ref[0, 0:1, :] = jnp.sum(y, axis=0, keepdims=True)
                s_ref[0, 1:2, :] = jnp.sum(y * y, axis=0, keepdims=True)


def _bn_relu_kernel(x_ref, scale_ref, shift_ref, o_ref, *, apply_relu):
    """Elementwise BN fold (+ ReLU) over one row tile, in-place via aliasing."""
    y = x_ref[...] * scale_ref[...] + shift_ref[...]
    if apply_relu:
        y = jnp.maximum(y, 0.0)
    o_ref[...] = y


# ------------------------------- JAX glue ----------------------------------

def _pair(v):
    return (v, v) if isinstance(v, int) else tuple(v)


def _im2col(x_nhwc, kh, kw, stride, padding, dilation):
    """(B,H,W,C) -> ((B*Ho*Wo, kh*kw*C), Ho, Wo) patches for a general conv."""
    B, H, W, C = x_nhwc.shape
    sh, sw = stride
    ph, pw = padding
    dh, dw = dilation
    Ho = (H + 2 * ph - dh * (kh - 1) - 1) // sh + 1
    Wo = (W + 2 * pw - dw * (kw - 1) - 1) // sw + 1
    xp = jnp.pad(x_nhwc, ((0, 0), (ph, ph), (pw, pw), (0, 0)))
    cols = []
    for dy in range(kh):
        for dx in range(kw):
            ys, xs = dy * dh, dx * dw
            cols.append(xp[:, ys: ys + (Ho - 1) * sh + 1: sh,
                            xs: xs + (Wo - 1) * sw + 1: sw, :])
    patches = jnp.concatenate(cols, axis=-1)          # (B, Ho, Wo, kh*kw*C)
    return patches.reshape(B * Ho * Wo, kh * kw * C), Ho, Wo


def basic_conv(x_nchw, w_oihw, bias=None, gamma=None, beta=None, *,
               stride=1, padding=0, dilation=1, groups=1,
               relu=True, bn=True, eps=BN_EPS,
               tile_rows=None, tile_k=None, matmul_dtype=jnp.float32):
    """BasicConv.forward: Conv2d (+ optional BN with batch stats, + ReLU)."""
    assert groups == 1  # TODO(synk): grouped convolution not implemented
    stride_t, pad_t, dil_t = _pair(stride), _pair(padding), _pair(dilation)

    B, Cin, H, W = x_nchw.shape
    Cout, Cin_w, kh, kw = w_oihw.shape
    assert Cin_w == Cin, (Cin_w, Cin)

    # TODO(synk): keep the surrounding model NHWC to avoid these transposes.
    x_nhwc = jnp.transpose(x_nchw, (0, 2, 3, 1)).astype(jnp.float32)
    patches, Ho, Wo = _im2col(x_nhwc, kh, kw, stride_t, pad_t, dil_t)
    R, K = patches.shape

    # TODO(synk): for Cout << 128, row-packing would avoid zero-padded lanes.
    Npad = _round_up(max(Cout, 1), 128)

    item = np.dtype(matmul_dtype).itemsize
    sub = 16 if np.dtype(matmul_dtype) == np.dtype(jnp.bfloat16) else 8

    # Lane-dense contraction dim; K-tiled when large.
    Kp = _round_up(K, 128)
    if tile_k is None:
        tile_k = Kp if Kp <= 2048 else 1024
    tile_k = max(128, _round_up(min(tile_k, Kp), 128))
    Kp = _round_up(Kp, tile_k)

    def _est_vmem(tr, tk):
        return (2 * tr * tk * item          # patch tile   (double buffered)
                + 2 * tk * Npad * item      # weight tile  (double buffered)
                + 2 * tr * Npad * 4         # output tile  (double buffered)
                + 2 * 8 * Npad * 4          # stats block
                + 2 * Npad * 4)             # bias row

    if tile_rows is None:
        tile_rows = 1024                    # big tiles amortize per-step cost
    tile_rows = max(sub, _round_up(min(tile_rows, _round_up(R, sub)), sub))
    while tile_rows > 128 and _est_vmem(tile_rows, tile_k) > _VMEM_TILE_BUDGET:
        tile_rows = _round_up(tile_rows // 2, sub)
    Rp = _round_up(R, tile_rows)
    n_row_tiles = Rp // tile_rows
    n_k_tiles = Kp // tile_k

    # Explicit scoped-VMEM limit: above v5e's 16 MiB default, below v7x's
    # 64 MiB physical VMEM.
    vmem_limit = int(min(max(_est_vmem(tile_rows, tile_k) + (8 << 20),
                             32 << 20), 48 << 20))

    patches = jnp.pad(patches, ((0, Rp - R), (0, Kp - K))).astype(matmul_dtype)

    # OIHW -> (dy, dx, cin, cout) to match the im2col column layout.
    w_mat = jnp.transpose(w_oihw.astype(jnp.float32), (2, 3, 1, 0))
    w_mat = jnp.pad(w_mat.reshape(K, Cout),
                    ((0, Kp - K), (0, Npad - Cout))).astype(matmul_dtype)

    def _row(v, default):
        v = default if v is None else v
        return jnp.pad(v.astype(jnp.float32).reshape(1, Cout),
                       ((0, 0), (0, Npad - Cout)))

    b_row = _row(bias, jnp.zeros((Cout,), jnp.float32))
    g_row = _row(gamma, jnp.ones((Cout,), jnp.float32))
    be_row = _row(beta, jnp.zeros((Cout,), jnp.float32))

    apply_bn = bool(bn)
    apply_relu = bool(relu)
    # A pre-BN conv bias cancels exactly under train-mode BN -> skip it, which
    # also makes zero-padded patch rows contribute exactly zero to the stats.
    add_bias = (bias is not None) and not apply_bn

    out_shapes = [jax.ShapeDtypeStruct((Rp, Npad), jnp.float32)]
    out_specs = [pl.BlockSpec((tile_rows, Npad), lambda i, k: (i, 0))]
    if apply_bn:
        out_shapes.append(
            jax.ShapeDtypeStruct((n_row_tiles, 8, Npad), jnp.float32))
        out_specs.append(pl.BlockSpec((1, 8, Npad), lambda i, k: (i, 0, 0)))

    kernel1 = functools.partial(
        _conv_matmul_kernel,
        add_bias=add_bias,
        apply_relu=apply_relu and not apply_bn,   # no-BN path fuses ReLU here
        compute_stats=apply_bn)

    outs = pl.pallas_call(
        kernel1,
        out_shape=tuple(out_shapes),
        grid=(n_row_tiles, n_k_tiles),
        in_specs=[
            pl.BlockSpec((tile_rows, tile_k), lambda i, k: (i, k)),
            pl.BlockSpec((tile_k, Npad), lambda i, k: (k, 0)),
            pl.BlockSpec((1, Npad), lambda i, k: (0, 0)),
        ],
        out_specs=tuple(out_specs),
        compiler_params=pltpu.CompilerParams(
            # Row tiles are independent (stats are per-tile partials) ->
            # parallel; K is the accumulation axis -> arbitrary (last).
            dimension_semantics=("parallel", "arbitrary"),
            vmem_limit_bytes=vmem_limit),
    )(patches, w_mat, b_row)

    if apply_bn:
        conv_flat, stats = outs
        # Combine per-row-tile partials (tiny, pure JAX).  Padded rows are
        # exactly zero (no bias under BN), so divide by the true count R.
        count = jnp.float32(R)
        mean = jnp.sum(stats[:, 0, :], axis=0, keepdims=True) / count
        # TODO(synk): E[x^2]-mean^2 in f32 is cancellation-prone for very large
        # batches; use a per-tile-centered combine for training-grade BN.
        var = jnp.maximum(
            jnp.sum(stats[:, 1, :], axis=0, keepdims=True) / count
            - mean * mean, 0.0)
        scale = g_row * lax.rsqrt(var + eps)
        shift = be_row - mean * scale

        out = pl.pallas_call(
            functools.partial(_bn_relu_kernel, apply_relu=apply_relu),
            out_shape=jax.ShapeDtypeStruct((Rp, Npad), jnp.float32),
            grid=(n_row_tiles,),
            in_specs=[
                pl.BlockSpec((tile_rows, Npad), lambda i: (i, 0)),
                pl.BlockSpec((1, Npad), lambda i: (0, 0)),
                pl.BlockSpec((1, Npad), lambda i: (0, 0)),
            ],
            out_specs=pl.BlockSpec((tile_rows, Npad), lambda i: (i, 0)),
            input_output_aliases={0: 0},   # in-place over the conv buffer
            compiler_params=pltpu.CompilerParams(
                dimension_semantics=("parallel",),
                vmem_limit_bytes=vmem_limit),
        )(conv_flat, scale, shift)
    else:
        out = outs[0]

    out = out[:R, :Cout].reshape(B, Ho, Wo, Cout)
    return jnp.transpose(out, (0, 3, 1, 2))  # back to NCHW


# ------------------------------ reference ----------------------------------

def _reference(x_nchw, w_oihw, bias, gamma, beta, stride, padding, dilation,
               relu, bn, eps):
    sh, sw = _pair(stride)
    ph, pw = _pair(padding)
    dh, dw = _pair(dilation)
    y = lax.conv_general_dilated(
        x_nchw, w_oihw, window_strides=(sh, sw),
        padding=[(ph, ph), (pw, pw)], rhs_dilation=(dh, dw),
        dimension_numbers=("NCHW", "OIHW", "NCHW"))
    if bias is not None:
        y = y + bias.reshape(1, -1, 1, 1)
    if bn:
        mean = jnp.mean(y, axis=(0, 2, 3), keepdims=True)
        var = jnp.mean((y - mean) ** 2, axis=(0, 2, 3), keepdims=True)
        y = (y - mean) / jnp.sqrt(var + eps)
        y = y * gamma.reshape(1, -1, 1, 1) + beta.reshape(1, -1, 1, 1)
    if relu:
        y = jnp.maximum(y, 0.0)
    return y


# --------------------------------- main -------------------------------------

if __name__ == "__main__":
    key = jax.random.PRNGKey(0)
    k1, k2, k3, k4, k5, k6, k7 = jax.random.split(key, 7)

    def check(out, ref, name, rtol=1e-3, atol=2e-3):
        assert out.shape == ref.shape, (name, out.shape, ref.shape)
        assert bool(jnp.all(jnp.isfinite(out))), name
        err = float(jnp.max(jnp.abs(out - ref)))
        assert bool(jnp.allclose(out, ref, rtol=rtol, atol=atol)), (name, err)

    # Case 1: 3x3, stride=1, pad=1, bn+relu, bias=False; tile_rows=128 forces
    # 4 row tiles -> exercises the multi-tile partial-stats reduction.
    B, Cin, H, W, Cout, ks = 2, 4, 16, 16, 32, 3
    x = jax.random.normal(k1, (B, Cin, H, W), jnp.float32)
    w = jax.random.normal(k2, (Cout, Cin, ks, ks), jnp.float32)
    w = w * (2.0 / (Cin * ks * ks)) ** 0.5
    gamma = 1.0 + 0.1 * jax.random.normal(k3, (Cout,), jnp.float32)
    beta = 0.1 * jax.random.normal(k4, (Cout,), jnp.float32)

    fwd1 = jax.jit(functools.partial(
        basic_conv, stride=1, padding=1, relu=True, bn=True, tile_rows=128))
    out1 = jax.block_until_ready(fwd1(x, w, None, gamma, beta))
    ref1 = _reference(x, w, None, gamma, beta, 1, 1, 1, True, True, BN_EPS)
    check(out1, ref1, "case1")

    # Case 2: stride=2, pad=0 -> odd row count exercises zero-padded im2col
    # rows (they must not perturb the batch statistics).
    fwd2 = jax.jit(functools.partial(
        basic_conv, stride=2, padding=0, relu=True, bn=True))
    out2 = jax.block_until_ready(fwd2(x, w, None, gamma, beta))
    ref2 = _reference(x, w, None, gamma, beta, 2, 0, 1, True, True, BN_EPS)
    check(out2, ref2, "case2")

    # Case 3: larger Cin with tile_k=128 -> 3 K tiles exercises the K-tiled
    # output-accumulator path.
    B3, Cin3, H3, Cout3 = 2, 40, 8, 16
    x3 = jax.random.normal(k5, (B3, Cin3, H3, H3), jnp.float32)
    w3 = jax.random.normal(k6, (Cout3, Cin3, ks, ks), jnp.float32)
    w3 = w3 * (2.0 / (Cin3 * ks * ks)) ** 0.5
    g3 = 1.0 + 0.1 * jax.random.normal(k3, (Cout3,), jnp.float32)
    b3 = 0.1 * jax.random.normal(k4, (Cout3,), jnp.float32)
    fwd3 = jax.jit(functools.partial(
        basic_conv, stride=1, padding=1, relu=True, bn=True, tile_k=128))
    out3 = jax.block_until_ready(fwd3(x3, w3, None, g3, b3))
    ref3 = _reference(x3, w3, None, g3, b3, 1, 1, 1, True, True, BN_EPS)
    check(out3, ref3, "case3")

    # Case 4: bn=False, bias=True, relu=True -> bias+ReLU fused into pass 1,
    # no second pallas_call.
    bias4 = 0.1 * jax.random.normal(k7, (Cout,), jnp.float32)
    fwd4 = jax.jit(functools.partial(
        basic_conv, stride=1, padding=0, relu=True, bn=False))
    out4 = jax.block_until_ready(fwd4(x, w, bias4, None, None))
    ref4 = _reference(x, w, bias4, None, None, 1, 0, 1, True, False, BN_EPS)
    check(out4, ref4, "case4")

    print("KERNEL_OK")
</pallas_src>

<mosaic_0001>
module attributes {stable_mosaic.version = 11 : i64} {
  func.func @_conv_matmul_kernel(%arg0: i32, %arg1: i32, %arg2: memref<128x128xf32, #tpu.memory_space<vmem>>, %arg3: memref<128x128xf32, #tpu.memory_space<vmem>>, %arg4: memref<1x128xf32, #tpu.memory_space<vmem>>, %arg5: memref<128x128xf32, #tpu.memory_space<vmem>>, %arg6: memref<1x8x128xf32, #tpu.memory_space<vmem>>) attributes {dimension_semantics = [#tpu.dimension_semantics<parallel>, #tpu.dimension_semantics<arbitrary>], iteration_bounds = array<i64: 4, 1>, scalar_prefetch = 0 : i64, scratch_operands = 0 : i64, tpu.core_type = #tpu.core_type<tc>, window_params = [{transform_indices = @transform_0, window_bounds = array<i64: 128, 128>}, {transform_indices = @transform_1, window_bounds = array<i64: 128, 128>}, {pipeline_mode = #tpu.pipeline_mode<synchronous>, transform_indices = @transform_2, window_bounds = array<i64: 1, 128>}, {transform_indices = @transform_3, window_bounds = array<i64: 128, 128>}, {transform_indices = @transform_4, window_bounds = array<i64: 1, 8, 128>}]} {
    %c0 = arith.constant 0 : index
    %c0_0 = arith.constant 0 : index
    %0 = vector.load %arg2[%c0, %c0_0] : memref<128x128xf32, #tpu.memory_space<vmem>>, vector<128x128xf32>
    %c0_1 = arith.constant 0 : index
    %c0_2 = arith.constant 0 : index
    %1 = vector.load %arg3[%c0_1, %c0_2] : memref<128x128xf32, #tpu.memory_space<vmem>>, vector<128x128xf32>
    %cst = arith.constant dense<0.000000e+00> : vector<128x128xf32>
    %2 = tpu.matmul %0, %1, %cst {dimension_numbers = #tpu.dot_dimension_numbers<[1], [0], [0], [1], [0, 0, 1, 1], [], []>} : vector<128x128xf32>, vector<128x128xf32>, vector<128x128xf32> -> vector<128x128xf32>
    %c0_i32 = arith.constant 0 : i32
    %3 = arith.cmpi eq, %arg1, %c0_i32 : i32
    %4 = arith.extui %3 : i1 to i32
    %c0_i32_3 = arith.constant 0 : i32
    %5 = arith.cmpi ne, %4, %c0_i32_3 : i32
    scf.if %5 {
      %c0_8 = arith.constant 0 : index
      %c0_9 = arith.constant 0 : index
      %12 = vector.load %arg5[%c0_8, %c0_9] : memref<128x128xf32, #tpu.memory_space<vmem>>, vector<128x128xf32>
      tpu.vector_store %arg5[%c0_8, %c0_9], %2 {strides = array<i32>} : memref<128x128xf32, #tpu.memory_space<vmem>>, vector<128x128xf32>,
    } else {
    }
    %c0_i32_4 = arith.constant 0 : i32
    %6 = arith.cmpi sgt, %arg1, %c0_i32_4 : i32
    %7 = arith.extui %6 : i1 to i32
    %c0_i32_5 = arith.constant 0 : i32
    %8 = arith.cmpi ne, %7, %c0_i32_5 : i32
    scf.if %8 {
      %c0_8 = arith.constant 0 : index
      %c0_9 = arith.constant 0 : index
      %12 = vector.load %arg5[%c0_8, %c0_9] : memref<128x128xf32, #tpu.memory_space<vmem>>, vector<128x128xf32>
      %13 = arith.addf %12, %2 : vector<128x128xf32>
      %c0_10 = arith.constant 0 : index
      %c0_11 = arith.constant 0 : index
      %14 = vector.load %arg5[%c0_10, %c0_11] : memref<128x128xf32, #tpu.memory_space<vmem>>, vector<128x128xf32>
      tpu.vector_store %arg5[%c0_10, %c0_11], %13 {strides = array<i32>} : memref<128x128xf32, #tpu.memory_space<vmem>>, vector<128x128xf32>,
    } else {
    }
    %c0_i32_6 = arith.constant 0 : i32
    %9 = arith.cmpi eq, %arg1, %c0_i32_6 : i32
    %10 = arith.extui %9 : i1 to i32
    %c0_i32_7 = arith.constant 0 : i32
    %11 = arith.cmpi ne, %10, %c0_i32_7 : i32
    scf.if %11 {
      %c0_8 = arith.constant 0 : index
      %c0_9 = arith.constant 0 : index
      %12 = vector.load %arg5[%c0_8, %c0_9] : memref<128x128xf32, #tpu.memory_space<vmem>>, vector<128x128xf32>
      %cst_10 = arith.constant 0.000000e+00 : f32
      %13 = vector.broadcast %cst_10 : f32 to vector<1x8x128xf32>
      %c0_11 = arith.constant 0 : index
      %c0_12 = arith.constant 0 : index
      %c0_13 = arith.constant 0 : index
      %14 = vector.load %arg6[%c0_11, %c0_12, %c0_13] : memref<1x8x128xf32, #tpu.memory_space<vmem>>, vector<1x8x128xf32>
      tpu.vector_store %arg6[%c0_11, %c0_12, %c0_13], %13 {strides = array<i32>} : memref<1x8x128xf32, #tpu.memory_space<vmem>>, vector<1x8x128xf32>,
      %cst_14 = arith.constant dense<0.000000e+00> : vector<128xf32>
      %15 = vector.multi_reduction <add>, %12, %cst_14 [0] : vector<128x128xf32> to vector<128xf32>
      %16 = vector.shape_cast %15 : vector<128xf32> to vector<1x128xf32>
      %c0_15 = arith.constant 0 : index
      %c0_16 = arith.constant 0 : index
      %c0_17 = arith.constant 0 : index
      %17 = vector.load %arg6[%c0_15, %c0_16, %c0_17] : memref<1x8x128xf32, #tpu.memory_space<vmem>>, vector<1x1x128xf32>
      %18 = vector.shape_cast %17 : vector<1x1x128xf32> to vector<1x128xf32>
      %19 = vector.shape_cast %16 : vector<1x128xf32> to vector<1x1x128xf32>
      tpu.vector_store %arg6[%c0_15, %c0_16, %c0_17], %19 {strides = array<i32>} : memref<1x8x128xf32, #tpu.memory_space<vmem>>, vector<1x1x128xf32>,
      %20 = arith.mulf %12, %12 : vector<128x128xf32>
      %cst_18 = arith.constant dense<0.000000e+00> : vector<128xf32>
      %21 = vector.multi_reduction <add>, %20, %cst_18 [0] : vector<128x128xf32> to vector<128xf32>
      %22 = vector.shape_cast %21 : vector<128xf32> to vector<1x128xf32>
      %c0_19 = arith.constant 0 : index
      %c1 = arith.constant 1 : index
      %c0_20 = arith.constant 0 : index
      %23 = vector.load %arg6[%c0_19, %c1, %c0_20] : memref<1x8x128xf32, #tpu.memory_space<vmem>>, vector<1x1x128xf32>
      %24 = vector.shape_cast %23 : vector<1x1x128xf32> to vector<1x128xf32>
      %25 = vector.shape_cast %22 : vector<1x128xf32> to vector<1x1x128xf32>
      tpu.vector_store %arg6[%c0_19, %c1, %c0_20], %25 {strides = array<i32>} : memref<1x8x128xf32, #tpu.memory_space<vmem>>, vector<1x1x128xf32>,
    } else {
    }
    return
  }
  func.func @transform_0(%arg0: i32, %arg1: i32) -> (i32, i32) {
    %c0_i32 = arith.constant 0 : i32
    return %arg0, %arg1 : i32, i32
  }
  func.func @transform_1(%arg0: i32, %arg1: i32) -> (i32, i32) {
    %c0_i32 = arith.constant 0 : i32
    %c0_i32_0 = arith.constant 0 : i32
    return %arg1, %c0_i32 : i32, i32
  }
  func.func @transform_2(%arg0: i32, %arg1: i32) -> (i32, i32) {
    %c0_i32 = arith.constant 0 : i32
    %c0_i32_0 = arith.constant 0 : i32
    %c0_i32_1 = arith.constant 0 : i32
    return %c0_i32, %c0_i32_0 : i32, i32
  }
  func.func @transform_3(%arg0: i32, %arg1: i32) -> (i32, i32) {
    %c0_i32 = arith.constant 0 : i32
    %c0_i32_0 = arith.constant 0 : i32
    return %arg0, %c0_i32 : i32, i32
  }
  func.func @transform_4(%arg0: i32, %arg1: i32) -> (i32, i32, i32) {
    %c0_i32 = arith.constant 0 : i32
    %c0_i32_0 = arith.constant 0 : i32
    %c0_i32_1 = arith.constant 0 : i32
    return %arg0, %c0_i32, %c0_i32_0 : i32, i32, i32
  }
}

module attributes {stable_mosaic.version = 11 : i64} {
  func.func @_bn_relu_kernel(%arg0: i32, %arg1: memref<128x128xf32, #tpu.memory_space<vmem>>, %arg2: memref<1x128xf32, #tpu.memory_space<vmem>>, %arg3: memref<1x128xf32, #tpu.memory_space<vmem>>, %arg4: memref<128x128xf32, #tpu.memory_space<vmem>>) attributes {dimension_semantics = [#tpu.dimension_semantics<parallel>], iteration_bounds = array<i64: 4>, scalar_prefetch = 0 : i64, scratch_operands = 0 : i64, tpu.core_type = #tpu.core_type<tc>, window_params = [{transform_indices = @transform_0, window_bounds = array<i64: 128, 128>}, {pipeline_mode = #tpu.pipeline_mode<synchronous>, transform_indices = @transform_1, window_bounds = array<i64: 1, 128>}, {pipeline_mode = #tpu.pipeline_mode<synchronous>, transform_indices = @transform_2, window_bounds = array<i64: 1, 128>}, {transform_indices = @transform_3, window_bounds = array<i64: 128, 128>}]} {
    %c0 = arith.constant 0 : index
    %c0_0 = arith.constant 0 : index
    %0 = vector.load %arg1[%c0, %c0_0] : memref<128x128xf32, #tpu.memory_space<vmem>>, vector<128x128xf32>
    %c0_1 = arith.constant 0 : index
    %c0_2 = arith.constant 0 : index
    %1 = vector.load %arg2[%c0_1, %c0_2] : memref<1x128xf32, #tpu.memory_space<vmem>>, vector<1x128xf32>
    %2 = vector.broadcast %1 : vector<1x128xf32> to vector<128x128xf32>
    %3 = arith.mulf %0, %2 : vector<128x128xf32>
    %c0_3 = arith.constant 0 : index
    %c0_4 = arith.constant 0 : index
    %4 = vector.load %arg3[%c0_3, %c0_4] : memref<1x128xf32, #tpu.memory_space<vmem>>, vector<1x128xf32>
    %5 = vector.broadcast %4 : vector<1x128xf32> to vector<128x128xf32>
    %6 = arith.addf %3, %5 : vector<128x128xf32>
    %cst = arith.constant 0.000000e+00 : f32
    %7 = vector.broadcast %cst : f32 to vector<128x128xf32>
    %8 = arith.maximumf %6, %7 : vector<128x128xf32>
    %c0_5 = arith.constant 0 : index
    %c0_6 = arith.constant 0 : index
    %9 = vector.load %arg4[%c0_5, %c0_6] : memref<128x128xf32, #tpu.memory_space<vmem>>, vector<128x128xf32>
    tpu.vector_store %arg4[%c0_5, %c0_6], %8 {strides = array<i32>} : memref<128x128xf32, #tpu.memory_space<vmem>>, vector<128x128xf32>,
    return
  }
  func.func @transform_0(%arg0: i32) -> (i32, i32) {
    %c0_i32 = arith.constant 0 : i32
    %c0_i32_0 = arith.constant 0 : i32
    return %arg0, %c0_i32 : i32, i32
  }
  func.func @transform_1(%arg0: i32) -> (i32, i32) {
    %c0_i32 = arith.constant 0 : i32
    %c0_i32_0 = arith.constant 0 : i32
    %c0_i32_1 = arith.constant 0 : i32
    return %c0_i32, %c0_i32_0 : i32, i32
  }
  func.func @transform_2(%arg0: i32) -> (i32, i32) {
    %c0_i32 = arith.constant 0 : i32
    %c0_i32_0 = arith.constant 0 : i32
    %c0_i32_1 = arith.constant 0 : i32
    return %c0_i32, %c0_i32_0 : i32, i32
  }
  func.func @transform_3(%arg0: i32) -> (i32, i32) {
    %c0_i32 = arith.constant 0 : i32
    %c0_i32_0 = arith.constant 0 : i32
    return %arg0, %c0_i32 : i32, i32
  }
}

</mosaic_0001>

<llo_original>
// kernel: basic_conv.3
$region0: #{basic_conv.3}
  #allocation0 [shape = 'u32[]', space=smem, size = 0x4, offset = 0x4, fixed_abs, tag = 'smem constant byte address 0x4 - core index']
  #allocation1 [shape = 'u32[144,128]{1,0:T(1,128)}', space=vmem, size = 0x12000, scoped, tag = 'internal scratch']
  %s0 = inlined_call_operand.vmem [shape: f32[512,128], index: 0, kind: input, shape index: {}, may-alias: {0,3}]
  %s1 = inlined_call_operand.vmem [shape: f32[1,128], index: 1, kind: input, shape index: {}]
  %s2 = inlined_call_operand.vmem [shape: f32[1,128], index: 2, kind: input, shape index: {}]
  %s3 = inlined_call_operand.vmem [shape: f32[512,128], index: 3, kind: output, shape index: {}, may-alias: {0,3}]
  %s4 = sld [smem:[#allocation0]]
  $region45: #{basic_conv.3} parent=0
    _
  %s6 = ssub.s32 1, %s4
  %s7 = scalar_select 0, %s6, %s4
  loop: start=0, step=1, limit=6
  $region2: #{basic_conv.3} parent=0 // loop_pre_header
    _
  $region3: #{basic_conv.3} parent=0 // loop_header
    %s9 = sphi 0, %s13
    %p10 = scmp.ge.s32.totalorder %s9, 6
    %s19 = sphi 0, %s21
    %s22 = sphi 0, %s19
    %s23 = sphi 0, %s22
    %s39 = sphi 0, %s23
    %s43 = sphi 0, %s43
    %s45 = sphi 0, %s43
    %s46 = sphi 0, %s45
    %s60 = sphi 0, %s46
    %s64 = sphi 0, %s64
    %s66 = sphi 0, %s64
    %s67 = sphi 0, %s66
    %s81 = sphi 0, %s67
    %s87 = sphi 0, %s89
    %s90 = sphi 0, %s87
    %s91 = sphi 0, %s90
    %s107 = sphi 0, %s91
  $region4: #{basic_conv.3} parent=0 // loop_header_branch
    %12 = sbr.rel (%p10) target = $region8
  $region5: #{basic_conv.3} parent=0 // loop_body
    %s14 = ssub.s32 %s9, 1
    %s15 = ssub.s32 %s9, 2
    %s16 = sadd.s32 %s9, 1
    %s17 = ssub.s32 %s9, %s16
    %p18 = scmp.eq.s32.totalorder %s17, 0
    %s20 = sadd.s32 %s19, 1
    %s21 = scalar_select %p18, %s19, %s20
    %p24 = pneg %p18
    %p25 = scmp.eq.s32.totalorder %s9, 3
    %p26 = por %p24, %p25
    %p27 = scmp.ne.s32.totalorder %s19, %s22
    %p28 = scmp.eq.s32.totalorder %s9, 0
    %p29 = por %p27, %p28
    %p30 = scmp.ne.s32.totalorder %s19, %s22
    %p31 = scmp.eq.s32.totalorder %s14, 3
    %p32 = por %p30, %p31
    %p33 = scmp.ne.s32.totalorder %s22, %s23
    %p34 = scmp.eq.s32.totalorder %s14, 0
    %p35 = por %p33, %p34
    %p36 = scmp.ne.s32.totalorder %s22, %s23
    %p37 = scmp.eq.s32.totalorder %s15, 3
    %p38 = por %p36, %p37
    %p40 = scmp.ne.s32.totalorder %s23, %s39
    %p41 = scmp.eq.s32.totalorder %s15, 0
    %p42 = por %p40, %p41
    %s44 = sadd.s32 %s43, 1
    %p47 = scmp.eq.s32.totalorder %s9, 3
    %p48 = scmp.ne.s32.totalorder %s43, %s45
    %p49 = scmp.eq.s32.totalorder %s9, 0
    %p50 = por %p48, %p49
    %p51 = scmp.ne.s32.totalorder %s43, %s45
    %p52 = scmp.eq.s32.totalorder %s14, 3
    %p53 = por %p51, %p52
    %p54 = scmp.ne.s32.totalorder %s45, %s46
    %p55 = scmp.eq.s32.totalorder %s14, 0
    %p56 = por %p54, %p55
    %p57 = scmp.ne.s32.totalorder %s45, %s46
    %p58 = scmp.eq.s32.totalorder %s15, 3
    %p59 = por %p57, %p58
    %p61 = scmp.ne.s32.totalorder %s46, %s60
    %p62 = scmp.eq.s32.totalorder %s15, 0
    %p63 = por %p61, %p62
    %s65 = sadd.s32 %s64, 1
    %p68 = scmp.eq.s32.totalorder %s9, 3
    %p69 = scmp.ne.s32.totalorder %s64, %s66
    %p70 = scmp.eq.s32.totalorder %s9, 0
    %p71 = por %p69, %p70
    %p72 = scmp.ne.s32.totalorder %s64, %s66
    %p73 = scmp.eq.s32.totalorder %s14, 3
    %p74 = por %p72, %p73
    %p75 = scmp.ne.s32.totalorder %s66, %s67
    %p76 = scmp.eq.s32.totalorder %s14, 0
    %p77 = por %p75, %p76
    %p78 = scmp.ne.s32.totalorder %s66, %s67
    %p79 = scmp.eq.s32.totalorder %s15, 3
    %p80 = por %p78, %p79
    %p82 = scmp.ne.s32.totalorder %s67, %s81
    %p83 = scmp.eq.s32.totalorder %s15, 0
    %p84 = por %p82, %p83
    %s85 = ssub.s32 %s9, %s16
    %p86 = scmp.eq.s32.totalorder %s85, 0
    %s88 = sadd.s32 %s87, 1
    %s89 = scalar_select %p86, %s87, %s88
    %p92 = pneg %p86
    %p93 = scmp.eq.s32.totalorder %s9, 3
    %p94 = por %p92, %p93
    %p95 = scmp.ne.s32.totalorder %s87, %s90
    %p96 = scmp.eq.s32.totalorder %s9, 0
    %p97 = por %p95, %p96
    %p98 = scmp.ne.s32.totalorder %s87, %s90
    %p99 = scmp.eq.s32.totalorder %s14, 3
    %p100 = por %p98, %p99
    %p101 = scmp.ne.s32.totalorder %s90, %s91
    %p102 = scmp.eq.s32.totalorder %s14, 0
    %p103 = por %p101, %p102
    %p104 = scmp.ne.s32.totalorder %s90, %s91
    %p105 = scmp.eq.s32.totalorder %s15, 3
    %p106 = por %p104, %p105
    %p108 = scmp.ne.s32.totalorder %s91, %s107
    %p109 = scmp.eq.s32.totalorder %s15, 0
    %p110 = por %p108, %p109
    %p111 = scmp.le.s32.totalorder 1, %s9
    %p112 = scmp.lt.s32.totalorder %s9, 5
    %p113 = pnand %p111, %p112
    %p114 = pneg %p113
    // Predicated region
    $region9: #{basic_conv.3} parent=5 // pred_check
      _
    $region10: #{basic_conv.3} parent=5 // pred_check_branch
      %116 = sbr.rel (%p113) target = $region12
    $region11: #{basic_conv.3} parent=5 // pred_region
      %s117 = ssub.s32 %s9, 1
      // Predicated region
      $region13: #{basic_conv.3} parent=11 // pred_check
        %p118 = pneg %p56
      $region14: #{basic_conv.3} parent=11 // pred_check_branch
        %120 = sbr.rel (%p118) target = $region16
      $region15: #{basic_conv.3} parent=11 // pred_region
        _
      $region16: #{basic_conv.3} parent=11 // pred_fallthru
        _
      // Predicated region
      $region17: #{basic_conv.3} parent=11 // pred_check
        %p121 = pneg %p77
      $region18: #{basic_conv.3} parent=11 // pred_check_branch
        %123 = sbr.rel (%p121) target = $region20
      $region19: #{basic_conv.3} parent=11 // pred_region
        _
      $region20: #{basic_conv.3} parent=11 // pred_fallthru
        _
    $region12: #{basic_conv.3} parent=5 // pred_fallthru
      _
    %p124 = scmp.lt.s32.totalorder %s9, 4
    // Predicated region
    $region21: #{basic_conv.3} parent=5 // pred_check
      %p125 = pneg %p124
    $region22: #{basic_conv.3} parent=5 // pred_check_branch
      %127 = sbr.rel (%p125) target = $region24
    $region23: #{basic_conv.3} parent=5 // pred_region
      // Predicated region
      $region25: #{basic_conv.3} parent=23 // pred_check
        %p128 = pneg %p29
      $region26: #{basic_conv.3} parent=23 // pred_check_branch
        %130 = sbr.rel (%p128) target = $region28
      $region27: #{basic_conv.3} parent=23 // pred_region
        %s131 = smul.u32 16, %s9
        %p132 = scmp.lt.s32.totalorder %s131, 63
        %s133 = scalar_select %p132, %s131, 63
        %s134 = smul.addr %s133, 8
        %s135 = scalar_lea.vmem %s0, %s134
        %s136 = smul.u32 16, %s9
      $region28: #{basic_conv.3} parent=23 // pred_fallthru
        _
    $region24: #{basic_conv.3} parent=5 // pred_fallthru
      _
    %p137 = scmp.le.s32.totalorder 1, %s9
    %p138 = scmp.lt.s32.totalorder %s9, 5
    %p139 = pnand %p137, %p138
    %p140 = pneg %p139
    // Predicated region
    $region29: #{basic_conv.3} parent=5 // pred_check
      _
    $region30: #{basic_conv.3} parent=5 // pred_check_branch
      %142 = sbr.rel (%p139) target = $region32
    $region31: #{basic_conv.3} parent=5 // pred_region
      %s143 = ssub.s32 %s9, 1
      %s144 = smul.u32 16, %s14
      %p145 = scmp.lt.s32.totalorder %s144, 63
      %s146 = scalar_select %p145, %s144, 63
      %s147 = smul.addr %s146, 8
      %s148 = scalar_lea.vmem %s0, %s147
      %p149 = pneg %p35
      %p150 = pneg %p32
      %p151 = pneg %p56
      %p152 = pneg %p53
      %p153 = pneg %p77
      %p154 = pneg %p74
      %p155 = pneg %p103
      %p156 = pneg %p100
      %s157 = smul.u32 16, %s14
      %p158 = scmp.lt.s32.totalorder %s157, 63
      %s159 = scalar_select %p158, %s157, 63
      %s160 = smul.addr %s159, 8
      %s161 = scalar_lea.vmem %s3, %s160
      %s162 = smul.u32 16, %s14
      %p163 = scmp.lt.s32.totalorder %s162, 63
      %s164 = scalar_select %p163, %s162, 63
      %s165 = smul.addr %s164, 8
      %s166 = scalar_lea.vmem %s0, %s165
      %s167 = smul.u32 16, %s14
      %s168 = smul.u32 16, %s14
      %p169 = scmp.lt.s32.totalorder %s168, 63
      %s170 = scalar_select %p169, %s168, 63
      %s171 = smul.addr %s170, 8
      %s172 = scalar_lea.vmem %s3, %s171
      %s173 = smul.u32 16, %s14
      %v174 = vld [vmem:[%s166] sm:$0xff]
      %v175 = vld [vmem:[%s166 + $0x8] sm:$0xff]
      %v176 = vld [vmem:[%s166 + $0x10] sm:$0xff]
      %v177 = vld [vmem:[%s166 + $0x18] sm:$0xff]
      %v178 = vld [vmem:[%s166 + $0x20] sm:$0xff]
      %v179 = vld [vmem:[%s166 + $0x28] sm:$0xff]
      %v180 = vld [vmem:[%s166 + $0x30] sm:$0xff]
      %v181 = vld [vmem:[%s166 + $0x38] sm:$0xff]
      %v182 = vld [vmem:[%s166 + $0x40] sm:$0xff]
      %v183 = vld [vmem:[%s166 + $0x48] sm:$0xff]
      %v184 = vld [vmem:[%s166 + $0x50] sm:$0xff]
      %v185 = vld [vmem:[%s166 + $0x58] sm:$0xff]
      %v186 = vld [vmem:[%s166 + $0x60] sm:$0xff]
      %v187 = vld [vmem:[%s166 + $0x68] sm:$0xff]
      %v188 = vld [vmem:[%s166 + $0x70] sm:$0xff]
      %v189 = vld [vmem:[%s166 + $0x78] sm:$0xff]
      %v190 = vld [vmem:[%s1] sm:$0x1]
      %v192 = vlaneseq
      %v193 = vshrl.u32 %v192, 7
      %v194 = vsub.s32 0, %v193
      %v195 = vrot.slane %v190, %v194
      %v197 = vmul.f32 %v174, %v195
      %v198 = vmul.f32 %v175, %v195
      %v199 = vmul.f32 %v176, %v195
      %v200 = vmul.f32 %v177, %v195
      %v201 = vmul.f32 %v178, %v195
      %v202 = vmul.f32 %v179, %v195
      %v203 = vmul.f32 %v180, %v195
      %v204 = vmul.f32 %v181, %v195
      %v205 = vmul.f32 %v182, %v195
      %v206 = vmul.f32 %v183, %v195
      %v207 = vmul.f32 %v184, %v195
      %v208 = vmul.f32 %v185, %v195
      %v209 = vmul.f32 %v186, %v195
      %v210 = vmul.f32 %v187, %v195
      %v211 = vmul.f32 %v188, %v195
      %v212 = vmul.f32 %v189, %v195
      %v213 = vld [vmem:[%s2] sm:$0x1]
      %v215 = vlaneseq
      %v216 = vshrl.u32 %v215, 7
      %v217 = vsub.s32 0, %v216
      %v218 = vrot.slane %v213, %v217
      %v220 = vadd.f32 %v197, %v218
      %v221 = vadd.f32 %v198, %v218
      %v222 = vadd.f32 %v199, %v218
      %v223 = vadd.f32 %v200, %v218
      %v224 = vadd.f32 %v201, %v218
      %v225 = vadd.f32 %v202, %v218
      %v226 = vadd.f32 %v203, %v218
      %v227 = vadd.f32 %v204, %v218
      %v228 = vadd.f32 %v205, %v218
      %v229 = vadd.f32 %v206, %v218
      %v230 = vadd.f32 %v207, %v218
      %v231 = vadd.f32 %v208, %v218
      %v232 = vadd.f32 %v209, %v218
      %v233 = vadd.f32 %v210, %v218
      %v234 = vadd.f32 %v211, %v218
      %v235 = vadd.f32 %v212, %v218
      %v236 = vmax.f32 %v220, 0.0
      %v237 = vmax.f32 %v221, 0.0
      %v238 = vmax.f32 %v222, 0.0
      %v239 = vmax.f32 %v223, 0.0
      %v240 = vmax.f32 %v224, 0.0
      %v241 = vmax.f32 %v225, 0.0
      %v242 = vmax.f32 %v226, 0.0
      %v243 = vmax.f32 %v227, 0.0
      %v244 = vmax.f32 %v228, 0.0
      %v245 = vmax.f32 %v229, 0.0
      %v246 = vmax.f32 %v230, 0.0
      %v247 = vmax.f32 %v231, 0.0
      %v248 = vmax.f32 %v232, 0.0
      %v249 = vmax.f32 %v233, 0.0
      %v250 = vmax.f32 %v234, 0.0
      %v251 = vmax.f32 %v235, 0.0
      %252 = vst [vmem:[%s172] sm:$0xff] %v236
      %253 = vst [vmem:[%s172 + $0x8] sm:$0xff] %v237
      %254 = vst [vmem:[%s172 + $0x10] sm:$0xff] %v238
      %255 = vst [vmem:[%s172 + $0x18] sm:$0xff] %v239
      %256 = vst [vmem:[%s172 + $0x20] sm:$0xff] %v240
      %257 = vst [vmem:[%s172 + $0x28] sm:$0xff] %v241
      %258 = vst [vmem:[%s172 + $0x30] sm:$0xff] %v242
      %259 = vst [vmem:[%s172 + $0x38] sm:$0xff] %v243
      %260 = vst [vmem:[%s172 + $0x40] sm:$0xff] %v244
      %261 = vst [vmem:[%s172 + $0x48] sm:$0xff] %v245
      %262 = vst [vmem:[%s172 + $0x50] sm:$0xff] %v246
      %263 = vst [vmem:[%s172 + $0x58] sm:$0xff] %v247
      %264 = vst [vmem:[%s172 + $0x60] sm:$0xff] %v248
      %265 = vst [vmem:[%s172 + $0x68] sm:$0xff] %v249
      %266 = vst [vmem:[%s172 + $0x70] sm:$0xff] %v250
      %267 = vst [vmem:[%s172 + $0x78] sm:$0xff] %v251
      %s268 = smul.u32 16, %s14
      %p269 = scmp.lt.s32.totalorder %s268, 63
      %s270 = scalar_select %p269, %s268, 63
      %s271 = smul.addr %s270, 8
      %s272 = scalar_lea.vmem %s3, %s271
      // Predicated region
      $region33: #{basic_conv.3} parent=31 // pred_check
        %p273 = pneg %p100
      $region34: #{basic_conv.3} parent=31 // pred_check_branch
        %275 = sbr.rel (%p273) target = $region36
      $region35: #{basic_conv.3} parent=31 // pred_region
        %s276 = smul.u32 16, %s14
      $region36: #{basic_conv.3} parent=31 // pred_fallthru
        _
    $region32: #{basic_conv.3} parent=5 // pred_fallthru
      _
    %p277 = scmp.le.s32.totalorder 2, %s9
    // Predicated region
    $region37: #{basic_conv.3} parent=5 // pred_check
      %p278 = pneg %p277
    $region38: #{basic_conv.3} parent=5 // pred_check_branch
      %280 = sbr.rel (%p278) target = $region40
    $region39: #{basic_conv.3} parent=5 // pred_region
      %s281 = ssub.s32 %s9, 2
      // Predicated region
      $region41: #{basic_conv.3} parent=39 // pred_check
        %p282 = pneg %p106
      $region42: #{basic_conv.3} parent=39 // pred_check_branch
        %284 = sbr.rel (%p282) target = $region44
      $region43: #{basic_conv.3} parent=39 // pred_region
        %s285 = smul.u32 16, %s15
        %p286 = scmp.lt.s32.totalorder %s285, 63
        %s287 = scalar_select %p286, %s285, 63
        %s288 = smul.addr %s287, 8
        %s289 = scalar_lea.vmem %s3, %s288
      $region44: #{basic_conv.3} parent=39 // pred_fallthru
        _
    $region40: #{basic_conv.3} parent=5 // pred_fallthru
      _
  $region6: #{basic_conv.3} parent=0 // loop_footer
    %s13 = sadd.s32 1, %s9
  $region7: #{basic_conv.3} parent=0 // loop_footer_branch
    %8 = sbr.rel target = $region3
  $region8: #{basic_conv.3} parent=0 // loop_exit
    _

// kernel: basic_conv.2
$region0: #{basic_conv.2}
  #allocation0 [shape = 'u32[]', space=smem, size = 0x4, offset = 0x4, fixed_abs, tag = 'smem constant byte address 0x4 - core index']
  #allocation1 [shape = 'u32[144,128]{1,0:T(1,128)}', space=vmem, size = 0x12000, scoped, tag = 'internal scratch']
  %s0 = inlined_call_operand.vmem [shape: f32[512,128], index: 0, kind: input, shape index: {}]
  %s1 = inlined_call_operand.vmem [shape: f32[128,128], index: 1, kind: input, shape index: {}]
  %s2 = inlined_call_operand.vmem [shape: f32[1,128], index: 2, kind: input, shape index: {}]
  %s3 = inlined_call_operand.vmem [shape: f32[512,128], index: 3, kind: output, shape index: {0}]
  %s4 = inlined_call_operand.vmem [shape: f32[4,8,128], index: 4, kind: output, shape index: {1}]
  %5 = xla_tuple %s3, %s4
  %s6 = sld [smem:[#allocation0]]
  $region65: #{basic_conv.2} parent=0
    _
  %s8 = ssub.s32 1, %s6
  %s9 = scalar_select 0, %s8, %s6
  loop: start=0, step=1, limit=6
  $region2: #{basic_conv.2} parent=0 // loop_pre_header
    _
  $region3: #{basic_conv.2} parent=0 // loop_header
    %s11 = sphi 0, %s15
    %p12 = scmp.ge.s32.totalorder %s11, 6
    %s18 = sphi 0, %s30
    %s19 = sphi 0, %s26
    %s20 = sphi 0, %s18
    %s21 = sphi 0, %s19
    %s22 = sphi 0, %s20
    %s23 = sphi 0, %s21
    %s35 = sphi 0, %s37
    %s38 = sphi 0, %s35
    %s39 = sphi 0, %s38
    %s55 = sphi 0, %s39
    %s61 = sphi 0, %s63
    %s64 = sphi 0, %s61
    %s65 = sphi 0, %s64
    %s81 = sphi 0, %s65
    %s85 = sphi 0, %s85
    %s87 = sphi 0, %s85
    %s88 = sphi 0, %s87
    %s102 = sphi 0, %s88
    %s108 = sphi 0, %s110
    %s111 = sphi 0, %s108
    %s112 = sphi 0, %s111
    %s128 = sphi 0, %s112
    %s134 = sphi 0, %s136
    %s137 = sphi 0, %s134
    %s138 = sphi 0, %s137
    %s154 = sphi 0, %s138
  $region4: #{basic_conv.2} parent=0 // loop_header_branch
    %14 = sbr.rel (%p12) target = $region8
  $region5: #{basic_conv.2} parent=0 // loop_body
    %s16 = ssub.s32 %s11, 1
    %s17 = ssub.s32 %s11, 2
    %s24 = sadd.s32 1, %s19
    %p25 = scmp.ge.s32.totalorder %s24, 1
    %s26 = scalar_select %p25, 0, %s24
    %s27 = sadd.s32 1, %s18
    %s28 = scalar_select %p25, %s27, %s18
    %p29 = scmp.ge.s32.totalorder %s28, 4
    %s30 = scalar_select %p29, 0, %s28
    %s31 = ssub.s32 %s18, %s30
    %s32 = ssub.s32 %s19, %s26
    %s33 = sor.u32 %s31, %s32
    %p34 = scmp.eq.s32.totalorder %s33, 0
    %s36 = sadd.s32 %s35, 1
    %s37 = scalar_select %p34, %s35, %s36
    %p40 = pneg %p34
    %p41 = scmp.eq.s32.totalorder %s11, 3
    %p42 = por %p40, %p41
    %p43 = scmp.ne.s32.totalorder %s35, %s38
    %p44 = scmp.eq.s32.totalorder %s11, 0
    %p45 = por %p43, %p44
    %p46 = scmp.ne.s32.totalorder %s35, %s38
    %p47 = scmp.eq.s32.totalorder %s16, 3
    %p48 = por %p46, %p47
    %p49 = scmp.ne.s32.totalorder %s38, %s39
    %p50 = scmp.eq.s32.totalorder %s16, 0
    %p51 = por %p49, %p50
    %p52 = scmp.ne.s32.totalorder %s38, %s39
    %p53 = scmp.eq.s32.totalorder %s17, 3
    %p54 = por %p52, %p53
    %p56 = scmp.ne.s32.totalorder %s39, %s55
    %p57 = scmp.eq.s32.totalorder %s17, 0
    %p58 = por %p56, %p57
    %s59 = ssub.s32 %s19, %s26
    %p60 = scmp.eq.s32.totalorder %s59, 0
    %s62 = sadd.s32 %s61, 1
    %s63 = scalar_select %p60, %s61, %s62
    %p66 = pneg %p60
    %p67 = scmp.eq.s32.totalorder %s11, 3
    %p68 = por %p66, %p67
    %p69 = scmp.ne.s32.totalorder %s61, %s64
    %p70 = scmp.eq.s32.totalorder %s11, 0
    %p71 = por %p69, %p70
    %p72 = scmp.ne.s32.totalorder %s61, %s64
    %p73 = scmp.eq.s32.totalorder %s16, 3
    %p74 = por %p72, %p73
    %p75 = scmp.ne.s32.totalorder %s64, %s65
    %p76 = scmp.eq.s32.totalorder %s16, 0
    %p77 = por %p75, %p76
    %p78 = scmp.ne.s32.totalorder %s64, %s65
    %p79 = scmp.eq.s32.totalorder %s17, 3
    %p80 = por %p78, %p79
    %p82 = scmp.ne.s32.totalorder %s65, %s81
    %p83 = scmp.eq.s32.totalorder %s17, 0
    %p84 = por %p82, %p83
    %s86 = sadd.s32 %s85, 1
    %p89 = scmp.eq.s32.totalorder %s11, 3
    %p90 = scmp.ne.s32.totalorder %s85, %s87
    %p91 = scmp.eq.s32.totalorder %s11, 0
    %p92 = por %p90, %p91
    %p93 = scmp.ne.s32.totalorder %s85, %s87
    %p94 = scmp.eq.s32.totalorder %s16, 3
    %p95 = por %p93, %p94
    %p96 = scmp.ne.s32.totalorder %s87, %s88
    %p97 = scmp.eq.s32.totalorder %s16, 0
    %p98 = por %p96, %p97
    %p99 = scmp.ne.s32.totalorder %s87, %s88
    %p100 = scmp.eq.s32.totalorder %s17, 3
    %p101 = por %p99, %p100
    %p103 = scmp.ne.s32.totalorder %s88, %s102
    %p104 = scmp.eq.s32.totalorder %s17, 0
    %p105 = por %p103, %p104
    %s106 = ssub.s32 %s18, %s30
    %p107 = scmp.eq.s32.totalorder %s106, 0
    %s109 = sadd.s32 %s108, 1
    %s110 = scalar_select %p107, %s108, %s109
    %p113 = pneg %p107
    %p114 = scmp.eq.s32.totalorder %s11, 3
    %p115 = por %p113, %p114
    %p116 = scmp.ne.s32.totalorder %s108, %s111
    %p117 = scmp.eq.s32.totalorder %s11, 0
    %p118 = por %p116, %p117
    %p119 = scmp.ne.s32.totalorder %s108, %s111
    %p120 = scmp.eq.s32.totalorder %s16, 3
    %p121 = por %p119, %p120
    %p122 = scmp.ne.s32.totalorder %s111, %s112
    %p123 = scmp.eq.s32.totalorder %s16, 0
    %p124 = por %p122, %p123
    %p125 = scmp.ne.s32.totalorder %s111, %s112
    %p126 = scmp.eq.s32.totalorder %s17, 3
    %p127 = por %p125, %p126
    %p129 = scmp.ne.s32.totalorder %s112, %s128
    %p130 = scmp.eq.s32.totalorder %s17, 0
    %p131 = por %p129, %p130
    %s132 = ssub.s32 %s18, %s30
    %p133 = scmp.eq.s32.totalorder %s132, 0
    %s135 = sadd.s32 %s134, 1
    %s136 = scalar_select %p133, %s134, %s135
    %p139 = pneg %p133
    %p140 = scmp.eq.s32.totalorder %s11, 3
    %p141 = por %p139, %p140
    %p142 = scmp.ne.s32.totalorder %s134, %s137
    %p143 = scmp.eq.s32.totalorder %s11, 0
    %p144 = por %p142, %p143
    %p145 = scmp.ne.s32.totalorder %s134, %s137
    %p146 = scmp.eq.s32.totalorder %s16, 3
    %p147 = por %p145, %p146
    %p148 = scmp.ne.s32.totalorder %s137, %s138
    %p149 = scmp.eq.s32.totalorder %s16, 0
    %p150 = por %p148, %p149
    %p151 = scmp.ne.s32.totalorder %s137, %s138
    %p152 = scmp.eq.s32.totalorder %s17, 3
    %p153 = por %p151, %p152
    %p155 = scmp.ne.s32.totalorder %s138, %s154
    %p156 = scmp.eq.s32.totalorder %s17, 0
    %p157 = por %p155, %p156
    %p158 = scmp.le.s32.totalorder 1, %s11
    %p159 = scmp.lt.s32.totalorder %s11, 5
    %p160 = pnand %p158, %p159
    %p161 = pneg %p160
    // Predicated region
    $region9: #{basic_conv.2} parent=5 // pred_check
      _
    $region10: #{basic_conv.2} parent=5 // pred_check_branch
      %163 = sbr.rel (%p160) target = $region12
    $region11: #{basic_conv.2} parent=5 // pred_region
      %s164 = ssub.s32 %s11, 1
      // Predicated region
      $region13: #{basic_conv.2} parent=11 // pred_check
        %p165 = pneg %p77
      $region14: #{basic_conv.2} parent=11 // pred_check_branch
        %167 = sbr.rel (%p165) target = $region16
      $region15: #{basic_conv.2} parent=11 // pred_region
        %s168 = smul.u32 16, %s21
        %p169 = scmp.lt.s32.totalorder %s168, 15
        %s170 = scalar_select %p169, %s168, 15
        %s171 = smul.addr %s170, 8
        %s172 = scalar_lea.vmem %s1, %s171
        %s173 = smul.u32 16, %s21
      $region16: #{basic_conv.2} parent=11 // pred_fallthru
        _
      // Predicated region
      $region17: #{basic_conv.2} parent=11 // pred_check
        %p174 = pneg %p98
      $region18: #{basic_conv.2} parent=11 // pred_check_branch
        %176 = sbr.rel (%p174) target = $region20
      $region19: #{basic_conv.2} parent=11 // pred_region
        _
      $region20: #{basic_conv.2} parent=11 // pred_fallthru
        _
    $region12: #{basic_conv.2} parent=5 // pred_fallthru
      _
    %p177 = scmp.lt.s32.totalorder %s11, 4
    // Predicated region
    $region21: #{basic_conv.2} parent=5 // pred_check
      %p178 = pneg %p177
    $region22: #{basic_conv.2} parent=5 // pred_check_branch
      %180 = sbr.rel (%p178) target = $region24
    $region23: #{basic_conv.2} parent=5 // pred_region
      // Predicated region
      $region25: #{basic_conv.2} parent=23 // pred_check
        %p181 = pneg %p45
      $region26: #{basic_conv.2} parent=23 // pred_check_branch
        %183 = sbr.rel (%p181) target = $region28
      $region27: #{basic_conv.2} parent=23 // pred_region
        %s184 = smul.u32 16, %s18
        %p185 = scmp.lt.s32.totalorder %s184, 63
        %s186 = scalar_select %p185, %s184, 63
        %p187 = scmp.lt.s32.totalorder %s19, 0
        %s188 = scalar_select %p187, %s19, 0
        %s189 = sadd.s32 %s188, %s186
        %s190 = smul.addr %s189, 8
        %s191 = scalar_lea.vmem %s0, %s190
        %s192 = smul.u32 16, %s18
      $region28: #{basic_conv.2} parent=23 // pred_fallthru
        _
    $region24: #{basic_conv.2} parent=5 // pred_fallthru
      _
    %p193 = scmp.le.s32.totalorder 1, %s11
    %p194 = scmp.lt.s32.totalorder %s11, 5
    %p195 = pnand %p193, %p194
    %p196 = pneg %p195
    // Predicated region
    $region29: #{basic_conv.2} parent=5 // pred_check
      _
    $region30: #{basic_conv.2} parent=5 // pred_check_branch
      %198 = sbr.rel (%p195) target = $region32
    $region31: #{basic_conv.2} parent=5 // pred_region
      %s199 = ssub.s32 %s11, 1
      %s200 = smul.u32 16, %s20
      %p201 = scmp.lt.s32.totalorder %s200, 63
      %s202 = scalar_select %p201, %s200, 63
      %p203 = scmp.lt.s32.totalorder %s21, 0
      %s204 = scalar_select %p203, %s21, 0
      %s205 = sadd.s32 %s204, %s202
      %s206 = smul.addr %s205, 8
      %s207 = scalar_lea.vmem %s0, %s206
      %p208 = pneg %p51
      %p209 = pneg %p48
      %s210 = smul.u32 16, %s21
      %p211 = scmp.lt.s32.totalorder %s210, 15
      %s212 = scalar_select %p211, %s210, 15
      %s213 = smul.addr %s212, 8
      %s214 = scalar_lea.vmem %s1, %s213
      %p215 = pneg %p77
      %p216 = pneg %p74
      %p217 = pneg %p98
      %p218 = pneg %p95
      %p219 = pneg %p124
      %p220 = pneg %p121
      %s221 = smul.u32 16, %s20
      %p222 = scmp.lt.s32.totalorder %s221, 63
      %s223 = scalar_select %p222, %s221, 63
      %s224 = smul.addr %s223, 8
      %s225 = scalar_lea.vmem %s3, %s224
      %p226 = pneg %p150
      %p227 = pneg %p147
      %p228 = scmp.lt.s32.totalorder %s20, 3
      %s229 = scalar_select %p228, %s20, 3
      %s230 = smul.addr %s229, 8
      %s231 = scalar_lea.vmem %s4, %s230
      %s232 = smul.u32 16, %s20
      %p233 = scmp.lt.s32.totalorder %s232, 63
      %s234 = scalar_select %p233, %s232, 63
      %p235 = scmp.lt.s32.totalorder %s21, 0
      %s236 = scalar_select %p235, %s21, 0
      %s237 = sadd.s32 %s236, %s234
      %s238 = smul.addr %s237, 8
      %s239 = scalar_lea.vmem %s0, %s238
      %s240 = smul.u32 16, %s20
      %s241 = smul.u32 16, %s21
      %p242 = scmp.lt.s32.totalorder %s241, 15
      %s243 = scalar_select %p242, %s241, 15
      %s244 = smul.addr %s243, 8
      %s245 = scalar_lea.vmem %s1, %s244
      %s246 = smul.u32 16, %s21
      %s247 = smul.u32 16, %s20
      %p248 = scmp.lt.s32.totalorder %s247, 63
      %s249 = scalar_select %p248, %s247, 63
      %s250 = smul.addr %s249, 8
      %s251 = scalar_lea.vmem %s3, %s250
      %s252 = smul.u32 16, %s20
      %p253 = scmp.lt.s32.totalorder %s20, 3
      %s254 = scalar_select %p253, %s20, 3
      %s255 = smul.addr %s254, 8
      %s256 = scalar_lea.vmem %s4, %s255
      %v257 = vld [vmem:[%s239] sm:$0xff]
      %v258 = vld [vmem:[%s239 + $0x8] sm:$0xff]
      %v259 = vld [vmem:[%s239 + $0x10] sm:$0xff]
      %v260 = vld [vmem:[%s239 + $0x18] sm:$0xff]
      %v261 = vld [vmem:[%s239 + $0x20] sm:$0xff]
      %v262 = vld [vmem:[%s239 + $0x28] sm:$0xff]
      %v263 = vld [vmem:[%s239 + $0x30] sm:$0xff]
      %v264 = vld [vmem:[%s239 + $0x38] sm:$0xff]
      %v265 = vld [vmem:[%s239 + $0x40] sm:$0xff]
      %v266 = vld [vmem:[%s239 + $0x48] sm:$0xff]
      %v267 = vld [vmem:[%s239 + $0x50] sm:$0xff]
      %v268 = vld [vmem:[%s239 + $0x58] sm:$0xff]
      %v269 = vld [vmem:[%s239 + $0x60] sm:$0xff]
      %v270 = vld [vmem:[%s239 + $0x68] sm:$0xff]
      %v271 = vld [vmem:[%s239 + $0x70] sm:$0xff]
      %v272 = vld [vmem:[%s239 + $0x78] sm:$0xff]
      %v273 = vld [vmem:[%s245] sm:$0xff]
      %v274 = vld [vmem:[%s245 + $0x8] sm:$0xff]
      %v275 = vld [vmem:[%s245 + $0x10] sm:$0xff]
      %v276 = vld [vmem:[%s245 + $0x18] sm:$0xff]
      %v277 = vld [vmem:[%s245 + $0x20] sm:$0xff]
      %v278 = vld [vmem:[%s245 + $0x28] sm:$0xff]
      %v279 = vld [vmem:[%s245 + $0x30] sm:$0xff]
      %v280 = vld [vmem:[%s245 + $0x38] sm:$0xff]
      %v281 = vld [vmem:[%s245 + $0x40] sm:$0xff]
      %v282 = vld [vmem:[%s245 + $0x48] sm:$0xff]
      %v283 = vld [vmem:[%s245 + $0x50] sm:$0xff]
      %v284 = vld [vmem:[%s245 + $0x58] sm:$0xff]
      %v285 = vld [vmem:[%s245 + $0x60] sm:$0xff]
      %v286 = vld [vmem:[%s245 + $0x68] sm:$0xff]
      %v287 = vld [vmem:[%s245 + $0x70] sm:$0xff]
      %v288 = vld [vmem:[%s245 + $0x78] sm:$0xff]
      %289 = vmatprep.subr.mxu0 0.0
      %290 = vmatpush1.msra.mxu0 %v273
      %291 = vmatprep.subr.mxu0 0.0
      %292 = vmatpush1.msra.mxu0 %v274
      %293 = vmatprep.subr.mxu0 0.0
      %294 = vmatpush1.msra.mxu0 %v275
      %295 = vmatprep.subr.mxu0 0.0
      %296 = vmatpush1.msra.mxu0 %v276
      %297 = vmatprep.subr.mxu0 0.0
      %298 = vmatpush1.msra.mxu0 %v277
      %299 = vmatprep.subr.mxu0 0.0
      %300 = vmatpush1.msra.mxu0 %v278
      %301 = vmatprep.subr.mxu0 0.0
      %302 = vmatpush1.msra.mxu0 %v279
      %303 = vmatprep.subr.mxu0 0.0
      %304 = vmatpush1.msra.mxu0 %v280
      %305 = vmatprep.subr.mxu0 0.0
      %306 = vmatpush1.msra.mxu0 %v281
      %307 = vmatprep.subr.mxu0 0.0
      %308 = vmatpush1.msra.mxu0 %v282
      %309 = vmatprep.subr.mxu0 0.0
      %310 = vmatpush1.msra.mxu0 %v283
      %311 = vmatprep.subr.mxu0 0.0
      %312 = vmatpush1.msra.mxu0 %v284
      %313 = vmatprep.subr.mxu0 0.0
      %314 = vmatpush1.msra.mxu0 %v285
      %315 = vmatprep.subr.mxu0 0.0
      %316 = vmatpush1.msra.mxu0 %v286
      %317 = vmatprep.subr.mxu0 0.0
      %318 = vmatpush1.msra.mxu0 %v287
      %319 = vmatprep.subr.mxu0 0.0
      %320 = vmatpush1.msra.mxu0 %v288
      %321 = vmatprep.subr.mxu0 0.0
      %322 = vmatpush1.msra.mxu0 0.0
      %323 = vmatprep.subr.mxu0 0.0
      %324 = vmatpush1.msra.mxu0 0.0
      %325 = vmatprep.subr.mxu0 0.0
      %326 = vmatpush1.msra.mxu0 0.0
      %327 = vmatprep.subr.mxu0 0.0
      %328 = vmatpush1.msra.mxu0 0.0
      %329 = vmatprep.subr.mxu0 0.0
      %330 = vmatpush1.msra.mxu0 0.0
      %331 = vmatprep.subr.mxu0 0.0
      %332 = vmatpush1.msra.mxu0 0.0
      %333 = vmatprep.subr.mxu0 0.0
      %334 = vmatpush1.msra.mxu0 0.0
      %335 = vmatprep.subr.mxu0 0.0
      %336 = vmatpush1.msra.mxu0 0.0
      %337 = vmatprep.subr.mxu0 0.0
      %338 = vmatpush1.msra.mxu0 0.0
      %339 = vmatprep.subr.mxu0 0.0
      %340 = vmatpush1.msra.mxu0 0.0
      %341 = vmatprep.subr.mxu0 0.0
      %342 = vmatpush1.msra.mxu0 0.0
      %343 = vmatprep.subr.mxu0 0.0
      %344 = vmatpush1.msra.mxu0 0.0
      %345 = vmatprep.subr.mxu0 0.0
      %346 = vmatpush1.msra.mxu0 0.0
      %347 = vmatprep.subr.mxu0 0.0
      %348 = vmatpush1.msra.mxu0 0.0
      %349 = vmatprep.subr.mxu0 0.0
      %350 = vmatpush1.msra.mxu0 0.0
      %351 = vmatprep.subr.mxu0 0.0
      %352 = vmatpush1.msra.mxu0 0.0
      %353 = vmatprep.mubr.f32.mxu0 0.0
      %354 = vmatmul.mubr.f32.gmra.mrb[0].mxu0 %v257
      %v355 = vpop.f32.mrb[0].mxu0
      %v356 = vadd.f32 0.0, %v355
      %v357 = vpop.f32.mrb[0].mxu0
      %358 = vmatprep.mubr.f32.mxu0 0.0
      %359 = vmatmul.mubr.f32.gmra.mrb[0].mxu0 %v258
      %v360 = vpop.f32.mrb[0].mxu0
      %v361 = vadd.f32 0.0, %v360
      %v362 = vpop.f32.mrb[0].mxu0
      %363 = vmatprep.mubr.f32.mxu0 0.0
      %364 = vmatmul.mubr.f32.gmra.mrb[0].mxu0 %v259
      %v365 = vpop.f32.mrb[0].mxu0
      %v366 = vadd.f32 0.0, %v365
      %v367 = vpop.f32.mrb[0].mxu0
      %368 = vmatprep.mubr.f32.mxu0 0.0
      %369 = vmatmul.mubr.f32.gmra.mrb[0].mxu0 %v260
      %v370 = vpop.f32.mrb[0].mxu0
      %v371 = vadd.f32 0.0, %v370
      %v372 = vpop.f32.mrb[0].mxu0
      %373 = vmatprep.mubr.f32.mxu0 0.0
      %374 = vmatmul.mubr.f32.gmra.mrb[0].mxu0 %v261
      %v375 = vpop.f32.mrb[0].mxu0
      %v376 = vadd.f32 0.0, %v375
      %v377 = vpop.f32.mrb[0].mxu0
      %378 = vmatprep.mubr.f32.mxu0 0.0
      %379 = vmatmul.mubr.f32.gmra.mrb[0].mxu0 %v262
      %v380 = vpop.f32.mrb[0].mxu0
      %v381 = vadd.f32 0.0, %v380
      %v382 = vpop.f32.mrb[0].mxu0
      %383 = vmatprep.mubr.f32.mxu0 0.0
      %384 = vmatmul.mubr.f32.gmra.mrb[0].mxu0 %v263
      %v385 = vpop.f32.mrb[0].mxu0
      %v386 = vadd.f32 0.0, %v385
      %v387 = vpop.f32.mrb[0].mxu0
      %388 = vmatprep.mubr.f32.mxu0 0.0
      %389 = vmatmul.mubr.f32.gmra.mrb[0].mxu0 %v264
      %v390 = vpop.f32.mrb[0].mxu0
      %v391 = vadd.f32 0.0, %v390
      %v392 = vpop.f32.mrb[0].mxu0
      %393 = vmatprep.mubr.f32.mxu0 0.0
      %394 = vmatmul.mubr.f32.gmra.mrb[0].mxu0 %v265
      %v395 = vpop.f32.mrb[0].mxu0
      %v396 = vadd.f32 0.0, %v395
      %v397 = vpop.f32.mrb[0].mxu0
      %398 = vmatprep.mubr.f32.mxu0 0.0
      %399 = vmatmul.mubr.f32.gmra.mrb[0].mxu0 %v266
      %v400 = vpop.f32.mrb[0].mxu0
      %v401 = vadd.f32 0.0, %v400
      %v402 = vpop.f32.mrb[0].mxu0
      %403 = vmatprep.mubr.f32.mxu0 0.0
      %404 = vmatmul.mubr.f32.gmra.mrb[0].mxu0 %v267
      %v405 = vpop.f32.mrb[0].mxu0
      %v406 = vadd.f32 0.0, %v405
      %v407 = vpop.f32.mrb[0].mxu0
      %408 = vmatprep.mubr.f32.mxu0 0.0
      %409 = vmatmul.mubr.f32.gmra.mrb[0].mxu0 %v268
      %v410 = vpop.f32.mrb[0].mxu0
      %v411 = vadd.f32 0.0, %v410
      %v412 = vpop.f32.mrb[0].mxu0
      %413 = vmatprep.mubr.f32.mxu0 0.0
      %414 = vmatmul.mubr.f32.gmra.mrb[0].mxu0 %v269
      %v415 = vpop.f32.mrb[0].mxu0
      %v416 = vadd.f32 0.0, %v415
      %v417 = vpop.f32.mrb[0].mxu0
      %418 = vmatprep.mubr.f32.mxu0 0.0
      %419 = vmatmul.mubr.f32.gmra.mrb[0].mxu0 %v270
      %v420 = vpop.f32.mrb[0].mxu0
      %v421 = vadd.f32 0.0, %v420
      %v422 = vpop.f32.mrb[0].mxu0
      %423 = vmatprep.mubr.f32.mxu0 0.0
      %424 = vmatmul.mubr.f32.gmra.mrb[0].mxu0 %v271
      %v425 = vpop.f32.mrb[0].mxu0
      %v426 = vadd.f32 0.0, %v425
      %v427 = vpop.f32.mrb[0].mxu0
      %428 = vmatprep.mubr.f32.mxu0 0.0
      %429 = vmatmul.mubr.f32.gmra.mrb[0].mxu0 %v272
      %v430 = vpop.f32.mrb[0].mxu0
      %v431 = vadd.f32 0.0, %v430
      %v432 = vpop.f32.mrb[0].mxu0
      %433 = vdwg.mxu0
      %p434 = scmp.eq.s32.totalorder %s21, 0
      // Predicated region
      $region33: #{basic_conv.2} parent=31 // pred_check
        %p435 = pneg %p434
      $region34: #{basic_conv.2} parent=31 // pred_check_branch
        %437 = sbr.rel (%p435) target = $region36
      $region35: #{basic_conv.2} parent=31 // pred_region
        %438 = vst [vmem:[%s251] sm:$0xff] %v356
        %439 = vst [vmem:[%s251 + $0x8] sm:$0xff] %v361
        %440 = vst [vmem:[%s251 + $0x10] sm:$0xff] %v366
        %441 = vst [vmem:[%s251 + $0x18] sm:$0xff] %v371
        %442 = vst [vmem:[%s251 + $0x20] sm:$0xff] %v376
        %443 = vst [vmem:[%s251 + $0x28] sm:$0xff] %v381
        %444 = vst [vmem:[%s251 + $0x30] sm:$0xff] %v386
        %445 = vst [vmem:[%s251 + $0x38] sm:$0xff] %v391
        %446 = vst [vmem:[%s251 + $0x40] sm:$0xff] %v396
        %447 = vst [vmem:[%s251 + $0x48] sm:$0xff] %v401
        %448 = vst [vmem:[%s251 + $0x50] sm:$0xff] %v406
        %449 = vst [vmem:[%s251 + $0x58] sm:$0xff] %v411
        %450 = vst [vmem:[%s251 + $0x60] sm:$0xff] %v416
        %451 = vst [vmem:[%s251 + $0x68] sm:$0xff] %v421
        %452 = vst [vmem:[%s251 + $0x70] sm:$0xff] %v426
        %453 = vst [vmem:[%s251 + $0x78] sm:$0xff] %v431
      $region36: #{basic_conv.2} parent=31 // pred_fallthru
        _
      %p454 = scmp.gt.s32.totalorder %s21, 0
      // Predicated region
      $region37: #{basic_conv.2} parent=31 // pred_check
        %p455 = pneg %p454
      $region38: #{basic_conv.2} parent=31 // pred_check_branch
        %457 = sbr.rel (%p455) target = $region40
      $region39: #{basic_conv.2} parent=31 // pred_region
        %v458 = vld [vmem:[%s251] sm:$0xff]
        %v459 = vld [vmem:[%s251 + $0x8] sm:$0xff]
        %v460 = vld [vmem:[%s251 + $0x10] sm:$0xff]
        %v461 = vld [vmem:[%s251 + $0x18] sm:$0xff]
        %v462 = vld [vmem:[%s251 + $0x20] sm:$0xff]
        %v463 = vld [vmem:[%s251 + $0x28] sm:$0xff]
        %v464 = vld [vmem:[%s251 + $0x30] sm:$0xff]
        %v465 = vld [vmem:[%s251 + $0x38] sm:$0xff]
        %v466 = vld [vmem:[%s251 + $0x40] sm:$0xff]
        %v467 = vld [vmem:[%s251 + $0x48] sm:$0xff]
        %v468 = vld [vmem:[%s251 + $0x50] sm:$0xff]
        %v469 = vld [vmem:[%s251 + $0x58] sm:$0xff]
        %v470 = vld [vmem:[%s251 + $0x60] sm:$0xff]
        %v471 = vld [vmem:[%s251 + $0x68] sm:$0xff]
        %v472 = vld [vmem:[%s251 + $0x70] sm:$0xff]
        %v473 = vld [vmem:[%s251 + $0x78] sm:$0xff]
        %v474 = vadd.f32 %v458, %v356
        %v475 = vadd.f32 %v459, %v361
        %v476 = vadd.f32 %v460, %v366
        %v477 = vadd.f32 %v461, %v371
        %v478 = vadd.f32 %v462, %v376
        %v479 = vadd.f32 %v463, %v381
        %v480 = vadd.f32 %v464, %v386
        %v481 = vadd.f32 %v465, %v391
        %v482 = vadd.f32 %v466, %v396
        %v483 = vadd.f32 %v467, %v401
        %v484 = vadd.f32 %v468, %v406
        %v485 = vadd.f32 %v469, %v411
        %v486 = vadd.f32 %v470, %v416
        %v487 = vadd.f32 %v471, %v421
        %v488 = vadd.f32 %v472, %v426
        %v489 = vadd.f32 %v473, %v431
        %490 = vst [vmem:[%s251] sm:$0xff] %v474
        %491 = vst [vmem:[%s251 + $0x8] sm:$0xff] %v475
        %492 = vst [vmem:[%s251 + $0x10] sm:$0xff] %v476
        %493 = vst [vmem:[%s251 + $0x18] sm:$0xff] %v477
        %494 = vst [vmem:[%s251 + $0x20] sm:$0xff] %v478
        %495 = vst [vmem:[%s251 + $0x28] sm:$0xff] %v479
        %496 = vst [vmem:[%s251 + $0x30] sm:$0xff] %v480
        %497 = vst [vmem:[%s251 + $0x38] sm:$0xff] %v481
        %498 = vst [vmem:[%s251 + $0x40] sm:$0xff] %v482
        %499 = vst [vmem:[%s251 + $0x48] sm:$0xff] %v483
        %500 = vst [vmem:[%s251 + $0x50] sm:$0xff] %v484
        %501 = vst [vmem:[%s251 + $0x58] sm:$0xff] %v485
        %502 = vst [vmem:[%s251 + $0x60] sm:$0xff] %v486
        %503 = vst [vmem:[%s251 + $0x68] sm:$0xff] %v487
        %504 = vst [vmem:[%s251 + $0x70] sm:$0xff] %v488
        %505 = vst [vmem:[%s251 + $0x78] sm:$0xff] %v489
      $region40: #{basic_conv.2} parent=31 // pred_fallthru
        _
      // Predicated region
      $region41: #{basic_conv.2} parent=31 // pred_check
        %p506 = pneg %p434
      $region42: #{basic_conv.2} parent=31 // pred_check_branch
        %508 = sbr.rel (%p506) target = $region44
      $region43: #{basic_conv.2} parent=31 // pred_region
        %v509 = vld [vmem:[%s251] sm:$0xff]
        %v510 = vld [vmem:[%s251 + $0x8] sm:$0xff]
        %v511 = vld [vmem:[%s251 + $0x10] sm:$0xff]
        %v512 = vld [vmem:[%s251 + $0x18] sm:$0xff]
        %v513 = vld [vmem:[%s251 + $0x20] sm:$0xff]
        %v514 = vld [vmem:[%s251 + $0x28] sm:$0xff]
        %v515 = vld [vmem:[%s251 + $0x30] sm:$0xff]
        %v516 = vld [vmem:[%s251 + $0x38] sm:$0xff]
        %v517 = vld [vmem:[%s251 + $0x40] sm:$0xff]
        %v518 = vld [vmem:[%s251 + $0x48] sm:$0xff]
        %v519 = vld [vmem:[%s251 + $0x50] sm:$0xff]
        %v520 = vld [vmem:[%s251 + $0x58] sm:$0xff]
        %v521 = vld [vmem:[%s251 + $0x60] sm:$0xff]
        %v522 = vld [vmem:[%s251 + $0x68] sm:$0xff]
        %v523 = vld [vmem:[%s251 + $0x70] sm:$0xff]
        %v524 = vld [vmem:[%s251 + $0x78] sm:$0xff]
        %525 = vst [vmem:[%s256] sm:$0xff] 0.0
        %v526 = vadd.f32 %v509, %v510
        %v527 = vadd.f32 %v526, %v511
        %v528 = vadd.f32 %v527, %v512
        %v529 = vadd.f32 %v528, %v513
        %v530 = vadd.f32 %v529, %v514
        %v531 = vadd.f32 %v530, %v515
        %v532 = vadd.f32 %v531, %v516
        %v533 = vadd.f32 %v532, %v517
        %v534 = vadd.f32 %v533, %v518
        %v535 = vadd.f32 %v534, %v519
        %v536 = vadd.f32 %v535, %v520
        %v537 = vadd.f32 %v536, %v521
        %v538 = vadd.f32 %v537, %v522
        %v539 = vadd.f32 %v538, %v523
        %v540 = vadd.f32 %v539, %v524
        %v541 = vrot.slane %v540, 4
        %v542 = vadd.f32 %v540, %v541
        %v543 = vrot.slane %v542, 2
        %v544 = vadd.f32 %v542, %v543
        %v545 = vrot.slane %v544, 1
        %v546 = vadd.f32 %v544, %v545
        %547 = vst [vmem:[%s256] sm:$0x1] %v546
        %v548 = vmul.f32 %v509, %v509
        %v549 = vmul.f32 %v510, %v510
        %v550 = vmul.f32 %v511, %v511
        %v551 = vmul.f32 %v512, %v512
        %v552 = vmul.f32 %v513, %v513
        %v553 = vmul.f32 %v514, %v514
        %v554 = vmul.f32 %v515, %v515
        %v555 = vmul.f32 %v516, %v516
        %v556 = vmul.f32 %v517, %v517
        %v557 = vmul.f32 %v518, %v518
        %v558 = vmul.f32 %v519, %v519
        %v559 = vmul.f32 %v520, %v520
        %v560 = vmul.f32 %v521, %v521
        %v561 = vmul.f32 %v522, %v522
        %v562 = vmul.f32 %v523, %v523
        %v563 = vmul.f32 %v524, %v524
        %v564 = vadd.f32 %v548, %v549
        %v565 = vadd.f32 %v564, %v550
        %v566 = vadd.f32 %v565, %v551
        %v567 = vadd.f32 %v566, %v552
        %v568 = vadd.f32 %v567, %v553
        %v569 = vadd.f32 %v568, %v554
        %v570 = vadd.f32 %v569, %v555
        %v571 = vadd.f32 %v570, %v556
        %v572 = vadd.f32 %v571, %v557
        %v573 = vadd.f32 %v572, %v558
        %v574 = vadd.f32 %v573, %v559
        %v575 = vadd.f32 %v574, %v560
        %v576 = vadd.f32 %v575, %v561
        %v577 = vadd.f32 %v576, %v562
        %v578 = vadd.f32 %v577, %v563
        %v579 = vrot.slane %v578, 4
        %v580 = vadd.f32 %v578, %v579
        %v581 = vrot.slane %v580, 2
        %v582 = vadd.f32 %v580, %v581
        %v583 = vrot.slane %v582, 1
        %v584 = vadd.f32 %v582, %v583
        %585 = vst [vmem:[%s256 + $0x1] sm:$0x1] %v584
      $region44: #{basic_conv.2} parent=31 // pred_fallthru
        _
      %s586 = smul.u32 16, %s20
      %p587 = scmp.lt.s32.totalorder %s586, 63
      %s588 = scalar_select %p587, %s586, 63
      %s589 = smul.addr %s588, 8
      %s590 = scalar_lea.vmem %s3, %s589
      %p591 = scmp.lt.s32.totalorder %s20, 3
      %s592 = scalar_select %p591, %s20, 3
      %s593 = smul.addr %s592, 8
      %s594 = scalar_lea.vmem %s4, %s593
      // Predicated region
      $region45: #{basic_conv.2} parent=31 // pred_check
        %p595 = pneg %p121
      $region46: #{basic_conv.2} parent=31 // pred_check_branch
        %597 = sbr.rel (%p595) target = $region48
      $region47: #{basic_conv.2} parent=31 // pred_region
        %s598 = smul.u32 16, %s20
      $region48: #{basic_conv.2} parent=31 // pred_fallthru
        _
      // Predicated region
      $region49: #{basic_conv.2} parent=31 // pred_check
        %p599 = pneg %p147
      $region50: #{basic_conv.2} parent=31 // pred_check_branch
        %601 = sbr.rel (%p599) target = $region52
      $region51: #{basic_conv.2} parent=31 // pred_region
        _
      $region52: #{basic_conv.2} parent=31 // pred_fallthru
        _
    $region32: #{basic_conv.2} parent=5 // pred_fallthru
      _
    %p602 = scmp.le.s32.totalorder 2, %s11
    // Predicated region
    $region53: #{basic_conv.2} parent=5 // pred_check
      %p603 = pneg %p602
    $region54: #{basic_conv.2} parent=5 // pred_check_branch
      %605 = sbr.rel (%p603) target = $region56
    $region55: #{basic_conv.2} parent=5 // pred_region
      %s606 = ssub.s32 %s11, 2
      // Predicated region
      $region57: #{basic_conv.2} parent=55 // pred_check
        %p607 = pneg %p127
      $region58: #{basic_conv.2} parent=55 // pred_check_branch
        %609 = sbr.rel (%p607) target = $region60
      $region59: #{basic_conv.2} parent=55 // pred_region
        %s610 = smul.u32 16, %s22
        %p611 = scmp.lt.s32.totalorder %s610, 63
        %s612 = scalar_select %p611, %s610, 63
        %s613 = smul.addr %s612, 8
        %s614 = scalar_lea.vmem %s3, %s613
      $region60: #{basic_conv.2} parent=55 // pred_fallthru
        _
      // Predicated region
      $region61: #{basic_conv.2} parent=55 // pred_check
        %p615 = pneg %p153
      $region62: #{basic_conv.2} parent=55 // pred_check_branch
        %617 = sbr.rel (%p615) target = $region64
      $region63: #{basic_conv.2} parent=55 // pred_region
        %p618 = scmp.lt.s32.totalorder %s22, 3
        %s619 = scalar_select %p618, %s22, 3
        %s620 = smul.addr %s619, 8
        %s621 = scalar_lea.vmem %s4, %s620
      $region64: #{basic_conv.2} parent=55 // pred_fallthru
        _
    $region56: #{basic_conv.2} parent=5 // pred_fallthru
      _
  $region6: #{basic_conv.2} parent=0 // loop_footer
    %s15 = sadd.s32 1, %s11
  $region7: #{basic_conv.2} parent=0 // loop_footer_branch
    %10 = sbr.rel target = $region3
  $region8: #{basic_conv.2} parent=0 // loop_exit
    _

</llo_original>
